<compile_context>
chip_gen: v7x
topology: tpu7x:2x2x1
jax: 0.10.0
libtpu: 0.0.40
codegen_flags: <defaults>
</compile_context>

<pallas_src>
import jax
import jax.numpy as jnp
from jax.experimental import pallas as pl
from jax.experimental.pallas import tpu as pltpu

EPS = 1e-5


def _round_up(n, m):
    return ((n + m - 1) // m) * m


def _default_lane_align():
    """256-align feature dims on v6e/v7x (2x256^2 MXU); 128 on v5e (4x128^2)."""
    try:
        kind = jax.devices()[0].device_kind.lower()
        if "v6" in kind or "v7" in kind:
            return 256
    except Exception:
        pass
    return 128


def _default_vmem_limit_bytes():
    """~75% of physical VMEM, capped at 100 MiB (v5e/v6e: 128 MiB, v7x: 64 MiB)."""
    try:
        cap = pltpu.get_tpu_info().vmem_capacity_bytes
        return int(min(cap * 3 // 4, 100 * 1024 * 1024))
    except Exception:
        return 64 * 1024 * 1024


def _estimate_fused_vmem_bytes(b_pad, d_max):
    w_bufs = 2 * d_max * d_max * 2      # double-buffered bf16 weight tiles
    p_bufs = 2 * 8 * d_max * 4          # double-buffered packed gamma/beta/bias rows
    x_buf = b_pad * d_max * 2           # resident bf16 input block
    act = b_pad * d_max * 2             # bf16 activation scratch
    out = b_pad * d_max * 4             # resident f32 output block
    temps = 4 * b_pad * d_max * 4       # y / BN f32 temporaries
    return w_bufs + p_bufs + x_buf + act + out + temps


# ---------------- fused Pallas kernel (one grid step == one layer) ----------------

def _make_fused_kernel(batch_actual, batch_pad):
    need_mask = batch_pad != batch_actual
    inv_b = 1.0 / float(batch_actual)

    def kernel(x_ref, w_ref, p_ref, o_ref, act_ref):
        layer = pl.program_id(0)
        last = pl.num_programs(0) - 1

        # Seed the persistent activation scratch with the (already bf16) input.
        @pl.when(layer == 0)
        def _():
            act_ref[...] = x_ref[...]

        # MXU matmul: bf16 operands, f32 accumulation.
        w = w_ref[0]                                  # (Dmax, Dmax) bf16
        y = jnp.dot(act_ref[...], w, preferred_element_type=jnp.float32)

        # Hidden layers: BatchNorm1d (train-mode batch stats) + ReLU.
        @pl.when(layer != last)
        def _():
            p = p_ref[0]                              # (8, Dmax) f32
            gamma = p[0:1, :]
            beta = p[1:2, :]
            # No hidden bias (it cancels in y - mean), and padded rows/lanes of y
            # are exactly zero, so unmasked sums with inv_b = 1/B are exact.
            mean = jnp.sum(y, axis=0, keepdims=True) * inv_b
            var = jnp.maximum(
                jnp.sum(y * y, axis=0, keepdims=True) * inv_b - mean * mean, 0.0)
            scale = gamma * jax.lax.rsqrt(var + EPS)  # EUP rsqrt; padded lanes -> 0
            z = (y - mean) * scale + beta
            a = jnp.maximum(z, 0.0)
            if need_mask:
                # Keep padded batch rows exactly zero for the next layer's stats.
                row_ids = jax.lax.broadcasted_iota(jnp.int32, (batch_pad, 1), 0)
                a = jnp.where(row_ids < batch_actual, a, 0.0)
            act_ref[...] = a.astype(act_ref.dtype)

        # Final layer: Linear bias only, write the resident output block.
        @pl.when(layer == last)
        def _():
            bias = p_ref[0][2:3, :]
            o_ref[...] = y + bias

    return kernel


# ---------------- one-time parameter packing (hoisted out of the call path) ----------------

def pack_mlp_params(params, input_dim, lane_align=None):
    """Pad + cast all weights once:
       w: (L, Dmax, Dmax) bf16, zero-padded
       p: (L, 8, Dmax) f32 — row 0 gamma, row 1 beta, row 2 final-layer bias."""
    if lane_align is None:
        lane_align = _default_lane_align()
    num_layers = len(params)
    dims = [input_dim] + [p[1].shape[1] for p in params]
    d_max = _round_up(max(dims), lane_align)

    w_stack = jnp.zeros((num_layers, d_max, d_max), jnp.float32)
    p_stack = jnp.zeros((num_layers, 8, d_max), jnp.float32)
    for li, p in enumerate(params):
        if p[0] == "hidden":
            _, w, _b, gamma, beta = p          # hidden bias dropped: cancels in BN
            din, dout = w.shape
            w_stack = w_stack.at[li, :din, :dout].set(w)
            p_stack = p_stack.at[li, 0, :dout].set(gamma)
            p_stack = p_stack.at[li, 1, :dout].set(beta)
        else:
            _, w, b = p
            din, dout = w.shape
            w_stack = w_stack.at[li, :din, :dout].set(w)
            p_stack = p_stack.at[li, 2, :dout].set(b)

    return {
        "w": w_stack.astype(jnp.bfloat16),
        "p": p_stack,
        "input_dim": input_dim,
        "output_dim": dims[-1],
        "d_max": d_max,
        "num_layers": num_layers,
    }


# ---------------- wrapper: pad input + single pipelined pallas_call ----------------

def mlp_forward(x, packed, vmem_limit_bytes=None):
    if vmem_limit_bytes is None:
        vmem_limit_bytes = _default_vmem_limit_bytes()

    batch, din = x.shape
    d_max = packed["d_max"]
    num_layers = packed["num_layers"]
    b_pad = _round_up(max(batch, 16), 16)      # bf16 packs 16 rows per vreg

    vmem_needed = _estimate_fused_vmem_bytes(b_pad, d_max)
    if vmem_needed > vmem_limit_bytes:
        raise ValueError(
            f"Fused MLP working set (~{vmem_needed / 2**20:.1f} MiB) exceeds the VMEM "
            f"limit ({vmem_limit_bytes / 2**20:.1f} MiB). "
            "TODO(synk): split into layer groups / feature-tile per layer.")

    # Only per-call prep: zero-pad + bf16-cast the input (halves its DMA).
    x_p = jnp.zeros((b_pad, d_max), jnp.bfloat16).at[:batch, :din].set(
        x.astype(jnp.bfloat16))

    kernel = _make_fused_kernel(batch, b_pad)

    out_p = pl.pallas_call(
        kernel,
        out_shape=jax.ShapeDtypeStruct((b_pad, d_max), jnp.float32),
        grid_spec=pltpu.PrefetchScalarGridSpec(
            num_scalar_prefetch=0,
            grid=(num_layers,),
            in_specs=[
                # Input: constant index map -> fetched once, resident across layers.
                pl.BlockSpec((b_pad, d_max), lambda l: (0, 0)),
                # Per-layer weight block: streamed + double-buffered by Pallas.
                pl.BlockSpec((1, d_max, d_max), lambda l: (l, 0, 0)),
                # Per-layer packed gamma/beta/bias rows (one DMA per layer).
                pl.BlockSpec((1, 8, d_max), lambda l: (l, 0, 0)),
            ],
            out_specs=pl.BlockSpec((b_pad, d_max), lambda l: (0, 0)),
            scratch_shapes=[pltpu.VMEM((b_pad, d_max), jnp.bfloat16)],  # activation
        ),
        compiler_params=pltpu.CompilerParams(
            dimension_semantics=("arbitrary",),
            vmem_limit_bytes=int(vmem_limit_bytes),
        ),
    )(x_p, packed["w"], packed["p"])

    return out_p[:batch, :packed["output_dim"]]


# ---------------- parameter setup (deterministic, synthetic) ----------------

def init_mlp_params(key, num_layers, input_dim, hidden_dim, output_dim):
    if num_layers < 1:
        raise ValueError("num_layers must be at least 1")
    params = []
    if num_layers == 1:
        dims_in, dims_out = [input_dim], [output_dim]
    else:
        dims_in = [input_dim] + [hidden_dim] * (num_layers - 1)
        dims_out = [hidden_dim] * (num_layers - 1) + [output_dim]
    for li, (din, dout) in enumerate(zip(dims_in, dims_out)):
        key, kw, kb = jax.random.split(key, 3)
        bound = 1.0 / jnp.sqrt(float(din))
        w = jax.random.uniform(kw, (din, dout), jnp.float32, -bound, bound)
        b = jax.random.uniform(kb, (dout,), jnp.float32, -bound, bound)
        if li < num_layers - 1:
            gamma = jnp.ones((dout,), jnp.float32)
            beta = jnp.zeros((dout,), jnp.float32)
            params.append(("hidden", w, b, gamma, beta))
        else:
            params.append(("final", w, b))
    return params


# ---------------- pure-JAX references ----------------

def mlp_reference_bf16(x, params):
    """Mirrors the kernel's numerics (bf16 matmuls, no hidden bias, E[y^2]-mean^2)."""
    act = x.astype(jnp.bfloat16)
    inv_b = 1.0 / x.shape[0]
    for p in params:
        if p[0] == "hidden":
            _, w, _b, gamma, beta = p
            y = jnp.dot(act, w.astype(jnp.bfloat16), preferred_element_type=jnp.float32)
            mean = jnp.sum(y, axis=0, keepdims=True) * inv_b
            var = jnp.maximum(
                jnp.sum(y * y, axis=0, keepdims=True) * inv_b - mean * mean, 0.0)
            z = (y - mean) * (gamma * jax.lax.rsqrt(var + EPS)) + beta
            act = jnp.maximum(z, 0.0).astype(jnp.bfloat16)
        else:
            _, w, b = p
            act = jnp.dot(act, w.astype(jnp.bfloat16),
                          preferred_element_type=jnp.float32) + b
    return act


def mlp_reference_f32(x, params):
    """Full-precision reference matching the PyTorch module (train-mode BN, with bias)."""
    h = x
    for p in params:
        if p[0] == "hidden":
            _, w, b, gamma, beta = p
            y = h @ w + b
            mean = jnp.mean(y, axis=0, keepdims=True)
            var = jnp.mean((y - mean) ** 2, axis=0, keepdims=True)
            h = jnp.maximum(gamma * (y - mean) * jax.lax.rsqrt(var + EPS) + beta, 0.0)
        else:
            _, w, b = p
            h = h @ w + b
    return h


if __name__ == "__main__":
    num_layers, input_dim, hidden_dim, output_dim = 3, 16, 32, 8
    batch = 12   # not a multiple of 16 -> exercises the padded-row mask path

    key = jax.random.PRNGKey(0)
    key, kx = jax.random.split(key)
    x = jax.random.normal(kx, (batch, input_dim), jnp.float32)
    params = init_mlp_params(key, num_layers, input_dim, hidden_dim, output_dim)

    packed = pack_mlp_params(params, input_dim)   # one-time pad + bf16 cast

    out = mlp_forward(x, packed)
    out = jax.block_until_ready(out)
    assert out.shape == (batch, output_dim)

    # Tight check vs. a reference with identical (bf16-matmul) numerics.
    ref_bf16 = mlp_reference_bf16(x, params)
    assert jnp.allclose(out, ref_bf16, atol=1e-3, rtol=1e-3), "mismatch vs bf16 reference"

    # Loose check vs. the full-f32 PyTorch-equivalent reference (with hidden bias).
    ref_f32 = mlp_reference_f32(x, params)
    assert jnp.allclose(out, ref_f32, atol=1e-1, rtol=1e-1), "mismatch vs f32 reference"

    print("KERNEL_OK")
</pallas_src>

<mosaic_0001>
module attributes {stable_mosaic.version = 11 : i64} {
  func.func @kernel(%arg0: i32, %arg1: memref<16x128xbf16, #tpu.memory_space<vmem>>, %arg2: memref<1x128x128xbf16, #tpu.memory_space<vmem>>, %arg3: memref<1x8x128xf32, #tpu.memory_space<vmem>>, %arg4: memref<16x128xf32, #tpu.memory_space<vmem>>, %arg5: memref<16x128xbf16, #tpu.memory_space<vmem>>) attributes {dimension_semantics = [#tpu.dimension_semantics<arbitrary>], iteration_bounds = array<i64: 3>, scalar_prefetch = 0 : i64, scratch_operands = 1 : i64, tpu.core_type = #tpu.core_type<tc>, window_params = [{pipeline_mode = #tpu.pipeline_mode<synchronous>, transform_indices = @transform_0, window_bounds = array<i64: 16, 128>}, {transform_indices = @transform_1, window_bounds = array<i64: 1, 128, 128>}, {transform_indices = @transform_2, window_bounds = array<i64: 1, 8, 128>}, {pipeline_mode = #tpu.pipeline_mode<synchronous>, transform_indices = @transform_3, window_bounds = array<i64: 16, 128>}]} {
    %c0_i32 = arith.constant 0 : i32
    %0 = arith.cmpi eq, %arg0, %c0_i32 : i32
    %1 = arith.extui %0 : i1 to i32
    %c0_i32_0 = arith.constant 0 : i32
    %2 = arith.cmpi ne, %1, %c0_i32_0 : i32
    scf.if %2 {
      %c0_8 = arith.constant 0 : index
      %c0_9 = arith.constant 0 : index
      %13 = vector.load %arg1[%c0_8, %c0_9] : memref<16x128xbf16, #tpu.memory_space<vmem>>, vector<16x128xbf16>
      %c0_10 = arith.constant 0 : index
      %c0_11 = arith.constant 0 : index
      %14 = vector.load %arg5[%c0_10, %c0_11] : memref<16x128xbf16, #tpu.memory_space<vmem>>, vector<16x128xbf16>
      tpu.vector_store %arg5[%c0_10, %c0_11], %13 {strides = array<i32>} : memref<16x128xbf16, #tpu.memory_space<vmem>>, vector<16x128xbf16>,
    } else {
    }
    %c0 = arith.constant 0 : index
    %c0_1 = arith.constant 0 : index
    %c0_2 = arith.constant 0 : index
    %3 = vector.load %arg2[%c0, %c0_1, %c0_2] : memref<1x128x128xbf16, #tpu.memory_space<vmem>>, vector<1x128x128xbf16>
    %4 = vector.shape_cast %3 : vector<1x128x128xbf16> to vector<128x128xbf16>
    %c0_3 = arith.constant 0 : index
    %c0_4 = arith.constant 0 : index
    %5 = vector.load %arg5[%c0_3, %c0_4] : memref<16x128xbf16, #tpu.memory_space<vmem>>, vector<16x128xbf16>
    %cst = arith.constant dense<0.000000e+00> : vector<16x128xf32>
    %6 = tpu.matmul %5, %4, %cst {dimension_numbers = #tpu.dot_dimension_numbers<[1], [0], [0], [1], [0, 0, 1, 1], [], []>} : vector<16x128xbf16>, vector<128x128xbf16>, vector<16x128xf32> -> vector<16x128xf32>
    %c2_i32 = arith.constant 2 : i32
    %7 = arith.cmpi ne, %arg0, %c2_i32 : i32
    %8 = arith.extui %7 : i1 to i32
    %c0_i32_5 = arith.constant 0 : i32
    %9 = arith.cmpi ne, %8, %c0_i32_5 : i32
    scf.if %9 {
      %c0_8 = arith.constant 0 : index
      %c0_9 = arith.constant 0 : index
      %c0_10 = arith.constant 0 : index
      %13 = vector.load %arg3[%c0_8, %c0_9, %c0_10] : memref<1x8x128xf32, #tpu.memory_space<vmem>>, vector<1x8x128xf32>
      %14 = vector.shape_cast %13 : vector<1x8x128xf32> to vector<8x128xf32>
      %15 = vector.extract_strided_slice %14 {offsets = [0, 0], sizes = [1, 128], strides = [1, 1]} : vector<8x128xf32> to vector<1x128xf32>
      %16 = vector.extract_strided_slice %14 {offsets = [1, 0], sizes = [1, 128], strides = [1, 1]} : vector<8x128xf32> to vector<1x128xf32>
      %cst_11 = arith.constant dense<0.000000e+00> : vector<128xf32>
      %17 = vector.multi_reduction <add>, %6, %cst_11 [0] : vector<16x128xf32> to vector<128xf32>
      %18 = vector.shape_cast %17 : vector<128xf32> to vector<1x128xf32>
      %cst_12 = arith.constant 0.0833333358 : f32
      %19 = vector.broadcast %cst_12 : f32 to vector<1x128xf32>
      %20 = arith.mulf %18, %19 : vector<1x128xf32>
      %21 = arith.mulf %6, %6 : vector<16x128xf32>
      %cst_13 = arith.constant dense<0.000000e+00> : vector<128xf32>
      %22 = vector.multi_reduction <add>, %21, %cst_13 [0] : vector<16x128xf32> to vector<128xf32>
      %23 = vector.shape_cast %22 : vector<128xf32> to vector<1x128xf32>
      %cst_14 = arith.constant 0.0833333358 : f32
      %24 = vector.broadcast %cst_14 : f32 to vector<1x128xf32>
      %25 = arith.mulf %23, %24 : vector<1x128xf32>
      %26 = arith.mulf %20, %20 : vector<1x128xf32>
      %27 = arith.subf %25, %26 : vector<1x128xf32>
      %cst_15 = arith.constant 0.000000e+00 : f32
      %28 = vector.broadcast %cst_15 : f32 to vector<1x128xf32>
      %29 = arith.maximumf %27, %28 : vector<1x128xf32>
      %cst_16 = arith.constant 9.99999974E-6 : f32
      %30 = vector.broadcast %cst_16 : f32 to vector<1x128xf32>
      %31 = arith.addf %29, %30 : vector<1x128xf32>
      %32 = math.rsqrt %31 : vector<1x128xf32>
      %33 = arith.mulf %15, %32 : vector<1x128xf32>
      %34 = vector.broadcast %20 : vector<1x128xf32> to vector<16x128xf32>
      %35 = arith.subf %6, %34 : vector<16x128xf32>
      %36 = vector.broadcast %33 : vector<1x128xf32> to vector<16x128xf32>
      %37 = arith.mulf %35, %36 : vector<16x128xf32>
      %38 = vector.broadcast %16 : vector<1x128xf32> to vector<16x128xf32>
      %39 = arith.addf %37, %38 : vector<16x128xf32>
      %cst_17 = arith.constant 0.000000e+00 : f32
      %40 = vector.broadcast %cst_17 : f32 to vector<16x128xf32>
      %41 = arith.maximumf %39, %40 : vector<16x128xf32>
      %42 = tpu.iota {dimensions = array<i32: 0>} : vector<16x1xi32>
      %c12_i32 = arith.constant 12 : i32
      %43 = vector.broadcast %c12_i32 : i32 to vector<16x1xi32>
      %44 = arith.cmpi slt, %42, %43 : vector<16x1xi32>
      %cst_18 = arith.constant 0.000000e+00 : f32
      %45 = vector.shape_cast %44 : vector<16x1xi1> to vector<16x1xi1>
      %46 = vector.broadcast %45 : vector<16x1xi1> to vector<16x128xi1>
      %47 = vector.broadcast %cst_18 : f32 to vector<16x128xf32>
      %48 = arith.select %46, %41, %47 : vector<16x128xi1>, vector<16x128xf32>
      %49 = arith.truncf %48 : vector<16x128xf32> to vector<16x128xbf16>
      %c0_19 = arith.constant 0 : index
      %c0_20 = arith.constant 0 : index
      %50 = vector.load %arg5[%c0_19, %c0_20] : memref<16x128xbf16, #tpu.memory_space<vmem>>, vector<16x128xbf16>
      tpu.vector_store %arg5[%c0_19, %c0_20], %49 {strides = array<i32>} : memref<16x128xbf16, #tpu.memory_space<vmem>>, vector<16x128xbf16>,
    } else {
    }
    %c2_i32_6 = arith.constant 2 : i32
    %10 = arith.cmpi eq, %arg0, %c2_i32_6 : i32
    %11 = arith.extui %10 : i1 to i32
    %c0_i32_7 = arith.constant 0 : i32
    %12 = arith.cmpi ne, %11, %c0_i32_7 : i32
    scf.if %12 {
      %c0_8 = arith.constant 0 : index
      %c0_9 = arith.constant 0 : index
      %c0_10 = arith.constant 0 : index
      %13 = vector.load %arg3[%c0_8, %c0_9, %c0_10] : memref<1x8x128xf32, #tpu.memory_space<vmem>>, vector<1x8x128xf32>
      %14 = vector.shape_cast %13 : vector<1x8x128xf32> to vector<8x128xf32>
      %15 = vector.extract_strided_slice %14 {offsets = [2, 0], sizes = [1, 128], strides = [1, 1]} : vector<8x128xf32> to vector<1x128xf32>
      %16 = vector.broadcast %15 : vector<1x128xf32> to vector<16x128xf32>
      %17 = arith.addf %6, %16 : vector<16x128xf32>
      %c0_11 = arith.constant 0 : index
      %c0_12 = arith.constant 0 : index
      %18 = vector.load %arg4[%c0_11, %c0_12] : memref<16x128xf32, #tpu.memory_space<vmem>>, vector<16x128xf32>
      tpu.vector_store %arg4[%c0_11, %c0_12], %17 {strides = array<i32>} : memref<16x128xf32, #tpu.memory_space<vmem>>, vector<16x128xf32>,
    } else {
    }
    return
  }
  func.func @transform_0(%arg0: i32) -> (i32, i32) {
    %c0_i32 = arith.constant 0 : i32
    %c0_i32_0 = arith.constant 0 : i32
    %c0_i32_1 = arith.constant 0 : i32
    return %c0_i32, %c0_i32_0 : i32, i32
  }
  func.func @transform_1(%arg0: i32) -> (i32, i32, i32) {
    %c0_i32 = arith.constant 0 : i32
    %c0_i32_0 = arith.constant 0 : i32
    %c0_i32_1 = arith.constant 0 : i32
    return %arg0, %c0_i32, %c0_i32_0 : i32, i32, i32
  }
  func.func @transform_2(%arg0: i32) -> (i32, i32, i32) {
    %c0_i32 = arith.constant 0 : i32
    %c0_i32_0 = arith.constant 0 : i32
    %c0_i32_1 = arith.constant 0 : i32
    return %arg0, %c0_i32, %c0_i32_0 : i32, i32, i32
  }
  func.func @transform_3(%arg0: i32) -> (i32, i32) {
    %c0_i32 = arith.constant 0 : i32
    %c0_i32_0 = arith.constant 0 : i32
    %c0_i32_1 = arith.constant 0 : i32
    return %c0_i32, %c0_i32_0 : i32, i32
  }
}

</mosaic_0001>

<llo_original>
// kernel: tpu_custom_call.1
$region0: #{tpu_custom_call.1}
  #allocation0 [shape = 'u32[]', space=smem, size = 0x4, offset = 0x4, fixed_abs, tag = 'smem constant byte address 0x4 - core index']
  #allocation1 [shape = 'u32[144,128]{1,0:T(1,128)}', space=vmem, size = 0x12000, scoped, tag = 'internal scratch']
  #allocation2 [shape = 'bf16[16,128]{1,0:T(16,128)(2,1)}', space=vmem, size = 0x1000, scoped, tag = 'scratch operand']
  %s0 = inlined_call_operand.hbm [shape: bf16[16,128], index: 0, kind: input, shape index: {}]
  %s1 = inlined_call_operand.hbm [shape: bf16[3,128,128], index: 1, kind: input, shape index: {}]
  %s2 = inlined_call_operand.hbm [shape: f32[3,8,128], index: 2, kind: input, shape index: {}]
  %s3 = inlined_call_operand.hbm [shape: f32[16,128], index: 3, kind: output, shape index: {}]
  %s4 = sld [smem:[#allocation0]]
  $region69: #{tpu_custom_call.1} parent=0
    _
  %s6 = ssub.s32 1, %s4
  %s7 = scalar_select 0, %s6, %s4
  $region1: #{tpu_custom_call.1} parent=0
    #allocation3 [shape = 'u8[4096]{0}', space=vmem, size = 0x1000, scoped, tag = 'input window, operand 0, single buffered']
    #allocation4 [shape = 's32[2]{0}', space=sflag, size = 0x8, scoped, tag = 'scoped memory for tpu_custom_call.1']
    #allocation5 [shape = 's32[2]{0}', space=sflag, size = 0x8, scoped, tag = 'scoped memory for tpu_custom_call.1']
    #allocation6 [shape = 'u8[65536]{0}', space=vmem, size = 0x10000, scoped, tag = 'input window, operand 1']
    #allocation7 [shape = 's32[2]{0}', space=sflag, size = 0x8, scoped, tag = 'scoped memory for tpu_custom_call.1']
    #allocation8 [shape = 'u8[8192]{0}', space=vmem, size = 0x2000, scoped, tag = 'input window, operand 2']
    #allocation9 [shape = 'u8[8192]{0}', space=vmem, size = 0x2000, scoped, tag = 'output window, operand 0, single buffered']
    %8 = vsyncpa [#allocation4], 0
    %9 = vsyncpa [#allocation7], 0
    %s10 = scalar_lea.sflag [#allocation7], 1
    %11 = vsyncpa %s10, 0
    %12 = vsyncpa [#allocation5], 0
    loop: start=0, step=1, limit=5
    $region2: #{tpu_custom_call.1} parent=1 // loop_pre_header
      _
    $region3: #{tpu_custom_call.1} parent=1 // loop_header
      %s14 = sphi 0, %s18
      %p15 = scmp.ge.s32.totalorder %s14, 5
      %s22 = sphi 0, %s22
      %s24 = sphi 0, %s22
      %s25 = sphi 0, %s24
      %s39 = sphi 0, %s25
      %s45 = sphi 0, %s47
      %s48 = sphi 0, %s45
      %s49 = sphi 0, %s48
      %s65 = sphi 0, %s49
      %s71 = sphi 0, %s73
      %s74 = sphi 0, %s71
      %s75 = sphi 0, %s74
      %s91 = sphi 0, %s75
      %s95 = sphi 0, %s95
      %s97 = sphi 0, %s95
      %s98 = sphi 0, %s97
      %s112 = sphi 0, %s98
    $region4: #{tpu_custom_call.1} parent=1 // loop_header_branch
      %17 = sbr.rel (%p15) target = $region8
    $region5: #{tpu_custom_call.1} parent=1 // loop_body
      %s19 = ssub.s32 %s14, 1
      %s20 = ssub.s32 %s14, 2
      %s21 = sadd.s32 %s14, 1
      %s23 = sadd.s32 %s22, 1
      %p26 = scmp.eq.s32.totalorder %s14, 2
      %p27 = scmp.ne.s32.totalorder %s22, %s24
      %p28 = scmp.eq.s32.totalorder %s14, 0
      %p29 = por %p27, %p28
      %p30 = scmp.ne.s32.totalorder %s22, %s24
      %p31 = scmp.eq.s32.totalorder %s19, 2
      %p32 = por %p30, %p31
      %p33 = scmp.ne.s32.totalorder %s24, %s25
      %p34 = scmp.eq.s32.totalorder %s19, 0
      %p35 = por %p33, %p34
      %p36 = scmp.ne.s32.totalorder %s24, %s25
      %p37 = scmp.eq.s32.totalorder %s20, 2
      %p38 = por %p36, %p37
      %p40 = scmp.ne.s32.totalorder %s25, %s39
      %p41 = scmp.eq.s32.totalorder %s20, 0
      %p42 = por %p40, %p41
      %s43 = ssub.s32 %s14, %s21
      %p44 = scmp.eq.s32.totalorder %s43, 0
      %s46 = sadd.s32 %s45, 1
      %s47 = scalar_select %p44, %s45, %s46
      %p50 = pneg %p44
      %p51 = scmp.eq.s32.totalorder %s14, 2
      %p52 = por %p50, %p51
      %p53 = scmp.ne.s32.totalorder %s45, %s48
      %p54 = scmp.eq.s32.totalorder %s14, 0
      %p55 = por %p53, %p54
      %p56 = scmp.ne.s32.totalorder %s45, %s48
      %p57 = scmp.eq.s32.totalorder %s19, 2
      %p58 = por %p56, %p57
      %p59 = scmp.ne.s32.totalorder %s48, %s49
      %p60 = scmp.eq.s32.totalorder %s19, 0
      %p61 = por %p59, %p60
      %p62 = scmp.ne.s32.totalorder %s48, %s49
      %p63 = scmp.eq.s32.totalorder %s20, 2
      %p64 = por %p62, %p63
      %p66 = scmp.ne.s32.totalorder %s49, %s65
      %p67 = scmp.eq.s32.totalorder %s20, 0
      %p68 = por %p66, %p67
      %s69 = ssub.s32 %s14, %s21
      %p70 = scmp.eq.s32.totalorder %s69, 0
      %s72 = sadd.s32 %s71, 1
      %s73 = scalar_select %p70, %s71, %s72
      %p76 = pneg %p70
      %p77 = scmp.eq.s32.totalorder %s14, 2
      %p78 = por %p76, %p77
      %p79 = scmp.ne.s32.totalorder %s71, %s74
      %p80 = scmp.eq.s32.totalorder %s14, 0
      %p81 = por %p79, %p80
      %p82 = scmp.ne.s32.totalorder %s71, %s74
      %p83 = scmp.eq.s32.totalorder %s19, 2
      %p84 = por %p82, %p83
      %p85 = scmp.ne.s32.totalorder %s74, %s75
      %p86 = scmp.eq.s32.totalorder %s19, 0
      %p87 = por %p85, %p86
      %p88 = scmp.ne.s32.totalorder %s74, %s75
      %p89 = scmp.eq.s32.totalorder %s20, 2
      %p90 = por %p88, %p89
      %p92 = scmp.ne.s32.totalorder %s75, %s91
      %p93 = scmp.eq.s32.totalorder %s20, 0
      %p94 = por %p92, %p93
      %s96 = sadd.s32 %s95, 1
      %p99 = scmp.eq.s32.totalorder %s14, 2
      %p100 = scmp.ne.s32.totalorder %s95, %s97
      %p101 = scmp.eq.s32.totalorder %s14, 0
      %p102 = por %p100, %p101
      %p103 = scmp.ne.s32.totalorder %s95, %s97
      %p104 = scmp.eq.s32.totalorder %s19, 2
      %p105 = por %p103, %p104
      %p106 = scmp.ne.s32.totalorder %s97, %s98
      %p107 = scmp.eq.s32.totalorder %s19, 0
      %p108 = por %p106, %p107
      %p109 = scmp.ne.s32.totalorder %s97, %s98
      %p110 = scmp.eq.s32.totalorder %s20, 2
      %p111 = por %p109, %p110
      %p113 = scmp.ne.s32.totalorder %s98, %s112
      %p114 = scmp.eq.s32.totalorder %s20, 0
      %p115 = por %p113, %p114
      %p116 = scmp.le.s32.totalorder 1, %s14
      %p117 = scmp.lt.s32.totalorder %s14, 4
      %p118 = pnand %p116, %p117
      %p119 = pneg %p118
      // Predicated region
      $region9: #{tpu_custom_call.1} parent=5 // pred_check
        _
      $region10: #{tpu_custom_call.1} parent=5 // pred_check_branch
        %121 = sbr.rel (%p118) target = $region12
      $region11: #{tpu_custom_call.1} parent=5 // pred_region
        %s122 = ssub.s32 %s14, 1
        // Predicated region
        $region13: #{tpu_custom_call.1} parent=11 // pred_check
          %p123 = pneg %p35
        $region14: #{tpu_custom_call.1} parent=11 // pred_check_branch
          %125 = sbr.rel (%p123) target = $region16
        $region15: #{tpu_custom_call.1} parent=11 // pred_region
          %s127 = ssub.s32 128, 128
          %128 = vsyncadd [#allocation4], %s127
          %s129 = sshll.u32 [#allocation3], 4
          %s130 = int_to_ptr.vmem [resolvable:$true] %s129
          %135 = dma.hbm_to_vmem [thread:$0]  %s0, 128, %s130, [#allocation4], 64, 64, 4
        $region16: #{tpu_custom_call.1} parent=11 // pred_fallthru
          _
      $region12: #{tpu_custom_call.1} parent=5 // pred_fallthru
        _
      %p136 = scmp.lt.s32.totalorder %s14, 3
      // Predicated region
      $region17: #{tpu_custom_call.1} parent=5 // pred_check
        %p137 = pneg %p136
      $region18: #{tpu_custom_call.1} parent=5 // pred_check_branch
        %139 = sbr.rel (%p137) target = $region20
      $region19: #{tpu_custom_call.1} parent=5 // pred_region
        // Predicated region
        $region21: #{tpu_custom_call.1} parent=19 // pred_check
          %p140 = pneg %p55
        $region22: #{tpu_custom_call.1} parent=19 // pred_check_branch
          %142 = sbr.rel (%p140) target = $region24
        $region23: #{tpu_custom_call.1} parent=19 // pred_region
          %s143 = sand.u32 %s14, 1
          %s144 = scalar_lea.sflag [#allocation7], %s143
          %s145 = sand.u32 %s45, 1
          %s146 = smul.addr %s145, 64
          %s147 = scalar_lea.vmem [#allocation6], %s146
          %s149 = ssub.s32 1024, 1024
          %150 = vsyncadd %s144, %s149
          %s151 = smul.addr %s14, 16
          %s152 = smul.addr %s151, 64
          %s153 = scalar_lea.hbm %s1, %s152
          %s154 = sshll.u32 %s147, 4
          %s155 = int_to_ptr.vmem [resolvable:$true] %s154
          %160 = dma.hbm_to_vmem [thread:$0]  %s153, 1024, %s155, %s144, 64, 64, 4
        $region24: #{tpu_custom_call.1} parent=19 // pred_fallthru
          _
        // Predicated region
        $region25: #{tpu_custom_call.1} parent=19 // pred_check
          %p161 = pneg %p81
        $region26: #{tpu_custom_call.1} parent=19 // pred_check_branch
          %163 = sbr.rel (%p161) target = $region28
        $region27: #{tpu_custom_call.1} parent=19 // pred_region
          %s164 = sand.u32 %s14, 1
          %s165 = scalar_lea.sflag [#allocation7], %s164
          %s166 = sand.u32 %s71, 1
          %s167 = smul.addr %s166, 8
          %s168 = scalar_lea.vmem [#allocation8], %s167
          %s170 = ssub.s32 128, 128
          %171 = vsyncadd %s165, %s170
          %s172 = smul.addr %s14, 128
          %s173 = scalar_lea.hbm %s2, %s172
          %s175 = sshll.u32 %s168, 4
          %s176 = int_to_ptr.vmem [resolvable:$true] %s175
          %178 = dma.hbm_to_vmem [thread:$0]  %s173, 128, %s176, %s165
        $region28: #{tpu_custom_call.1} parent=19 // pred_fallthru
          _
      $region20: #{tpu_custom_call.1} parent=5 // pred_fallthru
        _
      %p179 = scmp.le.s32.totalorder 1, %s14
      %p180 = scmp.lt.s32.totalorder %s14, 4
      %p181 = pnand %p179, %p180
      %p182 = pneg %p181
      // Predicated region
      $region29: #{tpu_custom_call.1} parent=5 // pred_check
        _
      $region30: #{tpu_custom_call.1} parent=5 // pred_check_branch
        %184 = sbr.rel (%p181) target = $region32
      $region31: #{tpu_custom_call.1} parent=5 // pred_region
        %s185 = ssub.s32 %s14, 1
        // Predicated region
        $region33: #{tpu_custom_call.1} parent=31 // pred_check
          %p186 = pneg %p35
        $region34: #{tpu_custom_call.1} parent=31 // pred_check_branch
          %188 = sbr.rel (%p186) target = $region36
        $region35: #{tpu_custom_call.1} parent=31 // pred_region
          %189 = dma.done [#allocation4], 128
        $region36: #{tpu_custom_call.1} parent=31 // pred_fallthru
          _
        %s190 = sand.u32 %s19, 1
        %s191 = scalar_lea.sflag [#allocation7], %s190
        %s192 = sand.u32 %s48, 1
        %s193 = smul.addr %s192, 64
        %s194 = scalar_lea.vmem [#allocation6], %s193
        // Predicated region
        $region37: #{tpu_custom_call.1} parent=31 // pred_check
          %p195 = pneg %p61
        $region38: #{tpu_custom_call.1} parent=31 // pred_check_branch
          %197 = sbr.rel (%p195) target = $region40
        $region39: #{tpu_custom_call.1} parent=31 // pred_region
          %198 = dma.done %s191, 1024
        $region40: #{tpu_custom_call.1} parent=31 // pred_fallthru
          _
        %s199 = sand.u32 %s19, 1
        %s200 = scalar_lea.sflag [#allocation7], %s199
        %s201 = sand.u32 %s74, 1
        %s202 = smul.addr %s201, 8
        %s203 = scalar_lea.vmem [#allocation8], %s202
        // Predicated region
        $region41: #{tpu_custom_call.1} parent=31 // pred_check
          %p204 = pneg %p87
        $region42: #{tpu_custom_call.1} parent=31 // pred_check_branch
          %206 = sbr.rel (%p204) target = $region44
        $region43: #{tpu_custom_call.1} parent=31 // pred_region
          %207 = dma.done %s200, 128
        $region44: #{tpu_custom_call.1} parent=31 // pred_fallthru
          _
        %p208 = pneg %p35
        %p209 = pneg %p32
        %s210 = sand.u32 %s19, 1
        %s211 = scalar_lea.sflag [#allocation7], %s210
        %s212 = sand.u32 %s48, 1
        %s213 = smul.addr %s212, 64
        %s214 = scalar_lea.vmem [#allocation6], %s213
        %p215 = pneg %p61
        %p216 = pneg %p58
        %s217 = sand.u32 %s19, 1
        %s218 = scalar_lea.sflag [#allocation7], %s217
        %s219 = sand.u32 %s74, 1
        %s220 = smul.addr %s219, 8
        %s221 = scalar_lea.vmem [#allocation8], %s220
        %p222 = pneg %p87
        %p223 = pneg %p84
        %p224 = pneg %p108
        %p225 = pneg %p105
        %p227 = scmp.eq.s32.totalorder %s19, 0
        // Predicated region
        $region45: #{tpu_custom_call.1} parent=31 // pred_check
          %p228 = pneg %p227
        $region46: #{tpu_custom_call.1} parent=31 // pred_check_branch
          %230 = sbr.rel (%p228) target = $region48
        $region47: #{tpu_custom_call.1} parent=31 // pred_region
          %v231 = vld [vmem:[#allocation3] sm:$0xf]
          %v232 = vld [vmem:[#allocation3 + $0x4] sm:$0xf]
          %v235 = vunpack.c.l.b16 %v231
          %v236 = vunpack.c.l.b16 %v232
          %v237 = vpack.c.b16 %v236, %v235
          %239 = vst [vmem:[#allocation2] sm:$0xff] %v237
        $region48: #{tpu_custom_call.1} parent=31 // pred_fallthru
          _
        %v240 = vld [vmem:[%s194] sm:$0xf]
        %v241 = vld [vmem:[%s194 + $0x4] sm:$0xf]
        %v242 = vld [vmem:[%s194 + $0x8] sm:$0xf]
        %v243 = vld [vmem:[%s194 + $0xc] sm:$0xf]
        %v244 = vld [vmem:[%s194 + $0x10] sm:$0xf]
        %v245 = vld [vmem:[%s194 + $0x14] sm:$0xf]
        %v246 = vld [vmem:[%s194 + $0x18] sm:$0xf]
        %v247 = vld [vmem:[%s194 + $0x1c] sm:$0xf]
        %v248 = vld [vmem:[%s194 + $0x20] sm:$0xf]
        %v249 = vld [vmem:[%s194 + $0x24] sm:$0xf]
        %v250 = vld [vmem:[%s194 + $0x28] sm:$0xf]
        %v251 = vld [vmem:[%s194 + $0x2c] sm:$0xf]
        %v252 = vld [vmem:[%s194 + $0x30] sm:$0xf]
        %v253 = vld [vmem:[%s194 + $0x34] sm:$0xf]
        %v254 = vld [vmem:[%s194 + $0x38] sm:$0xf]
        %v255 = vld [vmem:[%s194 + $0x3c] sm:$0xf]
        %v256 = vld [vmem:[#allocation2] sm:$0xff]
        %v273 = vunpack.c.l.b16 %v240
        %v274 = vunpack.c.l.b16 %v241
        %v275 = vunpack.c.l.b16 %v242
        %v276 = vunpack.c.l.b16 %v243
        %v277 = vunpack.c.l.b16 %v244
        %v278 = vunpack.c.l.b16 %v245
        %v279 = vunpack.c.l.b16 %v246
        %v280 = vunpack.c.l.b16 %v247
        %v281 = vunpack.c.l.b16 %v248
        %v282 = vunpack.c.l.b16 %v249
        %v283 = vunpack.c.l.b16 %v250
        %v284 = vunpack.c.l.b16 %v251
        %v285 = vunpack.c.l.b16 %v252
        %v286 = vunpack.c.l.b16 %v253
        %v287 = vunpack.c.l.b16 %v254
        %v288 = vunpack.c.l.b16 %v255
        %v289 = vpack.c.b16 %v274, %v273
        %v290 = vpack.c.b16 %v276, %v275
        %v291 = vpack.c.b16 %v278, %v277
        %v292 = vpack.c.b16 %v280, %v279
        %v293 = vpack.c.b16 %v282, %v281
        %v294 = vpack.c.b16 %v284, %v283
        %v295 = vpack.c.b16 %v286, %v285
        %v296 = vpack.c.b16 %v288, %v287
        %305 = vmatprep.subr.bf16.mxu0 0
        %306 = vmatpush1.bf16.msra.mxu0 %v289
        %307 = vmatprep.subr.bf16.mxu0 0
        %308 = vmatpush1.bf16.msra.mxu0 %v290
        %309 = vmatprep.subr.bf16.mxu0 0
        %310 = vmatpush1.bf16.msra.mxu0 %v291
        %311 = vmatprep.subr.bf16.mxu0 0
        %312 = vmatpush1.bf16.msra.mxu0 %v292
        %313 = vmatprep.subr.bf16.mxu0 0
        %314 = vmatpush1.bf16.msra.mxu0 %v293
        %315 = vmatprep.subr.bf16.mxu0 0
        %316 = vmatpush1.bf16.msra.mxu0 %v294
        %317 = vmatprep.subr.bf16.mxu0 0
        %318 = vmatpush1.bf16.msra.mxu0 %v295
        %319 = vmatprep.subr.bf16.mxu0 0
        %320 = vmatpush1.bf16.msra.mxu0 %v296
        %321 = vmatprep.subr.bf16.mxu0 0
        %322 = vmatpush1.bf16.msra.mxu0 0
        %323 = vmatprep.subr.bf16.mxu0 0
        %324 = vmatpush1.bf16.msra.mxu0 0
        %325 = vmatprep.subr.bf16.mxu0 0
        %326 = vmatpush1.bf16.msra.mxu0 0
        %327 = vmatprep.subr.bf16.mxu0 0
        %328 = vmatpush1.bf16.msra.mxu0 0
        %329 = vmatprep.subr.bf16.mxu0 0
        %330 = vmatpush1.bf16.msra.mxu0 0
        %331 = vmatprep.subr.bf16.mxu0 0
        %332 = vmatpush1.bf16.msra.mxu0 0
        %333 = vmatprep.subr.bf16.mxu0 0
        %334 = vmatpush1.bf16.msra.mxu0 0
        %335 = vmatprep.subr.bf16.mxu0 0
        %336 = vmatpush1.bf16.msra.mxu0 0
        %337 = vmatprep.mubr.bf16.mxu0 0
        %338 = vmatmul.mubr.bf16.gmra.mrb[0].mxu0 %v256
        %v339 = vpop.f32.mrb[0].mxu0
        %v340 = vadd.f32 0.0, %v339
        %v341 = vpop.f32.mrb[0].mxu0
        %v342 = vpop.f32.mrb[0].mxu0
        %v343 = vadd.f32 0.0, %v342
        %v344 = vpop.f32.mrb[0].mxu0
        %345 = vdwg.mxu0
        %p346 = scmp.ne.s32.totalorder %s19, 2
        // Predicated region
        $region49: #{tpu_custom_call.1} parent=31 // pred_check
          %p347 = pneg %p346
        $region50: #{tpu_custom_call.1} parent=31 // pred_check_branch
          %349 = sbr.rel (%p347) target = $region52
        $region51: #{tpu_custom_call.1} parent=31 // pred_region
          %v350 = vld [vmem:[%s203] sm:$0xff]
          %v351 = vadd.f32 %v340, %v343
          %v352 = vrot.slane %v351, 4
          %v353 = vadd.f32 %v351, %v352
          %v354 = vrot.slane %v353, 2
          %v355 = vadd.f32 %v353, %v354
          %v356 = vrot.slane %v355, 1
          %v357 = vadd.f32 %v355, %v356
          %v358 = vmul.f32 %v357, 0.083333336
          %v359 = vmul.f32 %v340, %v340
          %v360 = vmul.f32 %v343, %v343
          %v361 = vadd.f32 %v359, %v360
          %v362 = vrot.slane %v361, 4
          %v363 = vadd.f32 %v361, %v362
          %v364 = vrot.slane %v363, 2
          %v365 = vadd.f32 %v363, %v364
          %v366 = vrot.slane %v365, 1
          %v367 = vadd.f32 %v365, %v366
          %v368 = vmul.f32 %v367, 0.083333336
          %v369 = vmul.f32 %v358, %v358
          %v370 = vsub.f32 %v368, %v369
          %v371 = vmax.f32 %v370, 0.0
          %v372 = vadd.f32 %v371, 1e-05
          %v373 = vrsqrt.pop %v372
          %v374 = vmul.f32 %v350, %v373
          %v375 = vsub.f32 %v340, %v358
          %v376 = vsub.f32 %v343, %v358
          %v377 = vlaneseq
          %v378 = vshrl.u32 %v377, 7
          %v379 = vsub.s32 0, %v378
          %v380 = vrot.slane %v374, %v379
          %v381 = vmul.f32 %v375, %v380
          %v382 = vmul.f32 %v376, %v380
          %v383 = vlaneseq
          %v384 = vshrl.u32 %v383, 7
          %v385 = vsub.s32 1, %v384
          %v386 = vrot.slane %v350, %v385
          %v387 = vadd.f32 %v381, %v386
          %v388 = vadd.f32 %v382, %v386
          %v389 = vmax.f32 %v387, 0.0
          %v390 = vmax.f32 %v388, 0.0
          %v391 = vlaneseq
          %v392 = vshrl.u32 %v391, 7
          %v393 = vadd.s32 %v392, 8
          %vm394 = vcmp.lt.s32.totalorder %v392, 12
          %vm395 = vcmp.lt.s32.totalorder %v393, 12
          %v396 = vsel %vm394, 1, 0
          %v397 = vsel %vm395, 1, 0
          %vm398 = vcmp.eq.s32.totalorder %v396, 1
          %vm399 = vcmp.eq.s32.totalorder %v397, 1
          %v400 = vsel %vm398, %v389, 0.0
          %v401 = vsel %vm399, %v390, 0.0
          %v402 = vpack.c.bf16 %v401, %v400
          %403 = vst [vmem:[#allocation2] sm:$0xff] %v402
        $region52: #{tpu_custom_call.1} parent=31 // pred_fallthru
          _
        %p404 = scmp.eq.s32.totalorder %s19, 2
        // Predicated region
        $region53: #{tpu_custom_call.1} parent=31 // pred_check
          %p405 = pneg %p404
        $region54: #{tpu_custom_call.1} parent=31 // pred_check_branch
          %407 = sbr.rel (%p405) target = $region56
        $region55: #{tpu_custom_call.1} parent=31 // pred_region
          %v408 = vld [vmem:[%s203] sm:$0xff]
          %v409 = vlaneseq
          %v410 = vshrl.u32 %v409, 7
          %v411 = vsub.s32 2, %v410
          %v412 = vrot.slane %v408, %v411
          %v413 = vadd.f32 %v340, %v412
          %v414 = vadd.f32 %v343, %v412
          %415 = vst [vmem:[#allocation9] sm:$0xff] %v413
          %416 = vst [vmem:[#allocation9 + $0x8] sm:$0xff] %v414
        $region56: #{tpu_custom_call.1} parent=31 // pred_fallthru
          _
        // Predicated region
        $region57: #{tpu_custom_call.1} parent=31 // pred_check
          %p417 = pneg %p105
        $region58: #{tpu_custom_call.1} parent=31 // pred_check_branch
          %419 = sbr.rel (%p417) target = $region60
        $region59: #{tpu_custom_call.1} parent=31 // pred_region
          %s421 = ssub.s32 256, 256
          %422 = vsyncadd [#allocation5], %s421
          %s423 = sshll.u32 [#allocation9], 4
          %s424 = int_to_ptr.vmem [resolvable:$true] %s423
          %429 = dma.vmem_to_hbm [thread:$0]  %s424, 256, %s3, [#allocation5], 128, 128, 8
        $region60: #{tpu_custom_call.1} parent=31 // pred_fallthru
          _
        // Predicated region
        $region61: #{tpu_custom_call.1} parent=31 // pred_check
          %p430 = pneg %p105
        $region62: #{tpu_custom_call.1} parent=31 // pred_check_branch
          %432 = sbr.rel (%p430) target = $region64
        $region63: #{tpu_custom_call.1} parent=31 // pred_region
          %433 = dma.done [#allocation5], 256
        $region64: #{tpu_custom_call.1} parent=31 // pred_fallthru
          _
      $region32: #{tpu_custom_call.1} parent=5 // pred_fallthru
        _
      %p434 = scmp.le.s32.totalorder 2, %s14
      // Predicated region
      $region65: #{tpu_custom_call.1} parent=5 // pred_check
        %p435 = pneg %p434
      $region66: #{tpu_custom_call.1} parent=5 // pred_check_branch
        %437 = sbr.rel (%p435) target = $region68
      $region67: #{tpu_custom_call.1} parent=5 // pred_region
        %s438 = ssub.s32 %s14, 2
      $region68: #{tpu_custom_call.1} parent=5 // pred_fallthru
        _
    $region6: #{tpu_custom_call.1} parent=1 // loop_footer
      %s18 = sadd.s32 1, %s14
    $region7: #{tpu_custom_call.1} parent=1 // loop_footer_branch
      %13 = sbr.rel target = $region3
    $region8: #{tpu_custom_call.1} parent=1 // loop_exit
      _
    %439 = vsyncpa [#allocation4], 1
    %s440 = scalar_lea.sflag [#allocation4], 1
    %441 = vsyncpa %s440, 1
    %442 = vsyncpa [#allocation7], 1
    %s443 = scalar_lea.sflag [#allocation7], 1
    %444 = vsyncpa %s443, 1
    %445 = vsyncpa [#allocation5], 1
    %s446 = scalar_lea.sflag [#allocation5], 1
    %447 = vsyncpa %s446, 1

</llo_original>
